<compile_context>
chip_gen: v7x
topology: tpu7x:2x2x1
jax: 0.10.0
libtpu: 0.0.40
codegen_flags: <defaults>
</compile_context>

<pallas_src>
import functools
import math

import jax
import jax.numpy as jnp
from jax.experimental import pallas as pl
from jax.experimental.pallas import tpu as pltpu

LANES = 128
SUBLANES = 8
MAX_ROW_BLOCK = 8192                 # 8192 * 128 * 4B = 4 MiB f32 per input tile
VMEM_LIMIT_BYTES = 48 * 1024 * 1024  # headroom for 16 MiB of pipeline buffers


def _round_up(x: int, m: int) -> int:
    return ((x + m - 1) // m) * m


def _num_tensorcores() -> int:
    # v7x has 2 TensorCores per device; v5e / v6e have 1.  Default to 1 so we
    # never induce over-coverage masking on single-core chips.
    try:
        kind = jax.devices()[0].device_kind.lower()
    except Exception:
        return 1
    return 2 if "v7" in kind else 1


def _f1_stats_kernel(pred_ref, target_ref, tp_ref, pb_ref, t_ref, *,
                     logit_thr: float, rows_valid: int, row_block: int,
                     acc_rows: int, blocks_per_core: int, total_blocks: int,
                     needs_row_mask: bool, may_overrun: bool):
    p = pl.program_id(0)
    j = pl.program_id(1)

    @pl.when(j == 0)
    def _init():
        tp_ref[...] = jnp.zeros_like(tp_ref)
        pb_ref[...] = jnp.zeros_like(pb_ref)
        t_ref[...] = jnp.zeros_like(t_ref)

    last = total_blocks - 1
    groups = row_block // acc_rows

    def accumulate(mask_rows: bool):
        # Native-dtype loads, cast on the VPU (keeps HBM traffic minimal).
        pred = pred_ref[...].astype(jnp.float32)
        tgt = target_ref[...].astype(jnp.float32)
        # sigmoid(x) > thr  <=>  x > logit(thr): one VPU compare, no EUP work.
        pb_bool = pred > jnp.float32(logit_thr)
        if mask_rows:
            # Only the statically-known last block can over-cover, and only
            # whole rows can be invalid (the <128-lane tail is handled in the
            # wrapper), so a row-index compare suffices (no int32 overflow).
            row0 = last * row_block
            local_rows = jax.lax.broadcasted_iota(jnp.int32, pred.shape, 0)
            valid = (local_rows + row0) < rows_valid
            pb_bool = jnp.logical_and(pb_bool, valid)
            tgt = jnp.where(valid, tgt, 0.0)
        pb = pb_bool.astype(jnp.float32)
        tp_elem = jnp.where(pb_bool, tgt, 0.0)        # == pb * tgt, no multiply
        # Pure VPU adds onto resident (acc_rows, 128) blocks; no XLU / scalar
        # reduction and several independent add chains per statistic.
        tp_ref[...] += jnp.sum(tp_elem.reshape(groups, acc_rows, LANES), axis=0)
        pb_ref[...] += jnp.sum(pb.reshape(groups, acc_rows, LANES), axis=0)
        t_ref[...] += jnp.sum(tgt.reshape(groups, acc_rows, LANES), axis=0)

    if not (needs_row_mask or may_overrun):
        # Fast path: every block is fully valid -> no masking, no predicates.
        accumulate(False)
    else:
        logical_block = p * blocks_per_core + j
        if needs_row_mask:
            interior = logical_block < last
        else:
            interior = logical_block <= last

        @pl.when(interior)
        def _():
            accumulate(False)

        if needs_row_mask:
            @pl.when(logical_block == last)
            def _():
                accumulate(True)
        # logical_block > last (clamped duplicate blocks on the 2-core split)
        # contributes nothing.


def f1_score_pallas(pred: jax.Array, target: jax.Array,
                    threshold: float = 0.5, smooth: float = 1e-06) -> jax.Array:
    """Scalar F1 score matching the PyTorch F1Score module."""
    assert 0.0 < threshold < 1.0, "logit-domain compare requires 0 < threshold < 1"
    logit_thr = math.log(threshold) - math.log1p(-threshold)

    pred_flat = pred.reshape(-1)          # native dtype; cast happens in-kernel
    target_flat = target.reshape(-1)
    n = pred_flat.shape[0]

    rows = n // LANES
    main_n = rows * LANES

    tp = jnp.float32(0.0)
    sum_pb = jnp.float32(0.0)
    sum_t = jnp.float32(0.0)

    if rows > 0:
        # Lane-dense 2-D view, no padding copy: ragged row coverage (if any)
        # is masked in-kernel on the single boundary block only.
        pred2d = pred_flat[:main_n].reshape(rows, LANES)
        target2d = target_flat[:main_n].reshape(rows, LANES)

        row_block = min(MAX_ROW_BLOCK, _round_up(rows, SUBLANES))
        total_blocks = pl.cdiv(rows, row_block)
        ncores = max(1, min(_num_tensorcores(), total_blocks))
        blocks_per_core = pl.cdiv(total_blocks, ncores)
        acc_rows = 32 if row_block % 32 == 0 else SUBLANES

        needs_row_mask = total_blocks * row_block > rows
        may_overrun = ncores * blocks_per_core > total_blocks
        last = total_blocks - 1

        if may_overrun:
            def in_map(p, j):
                # Clamp over-covered (p, j) pairs onto a real block; their
                # contribution is skipped in-kernel.
                return (jnp.minimum(p * blocks_per_core + j, last), 0)
        else:
            def in_map(p, j):
                return (p * blocks_per_core + j, 0)

        def out_map(p, j):
            return (p, 0)

        kernel = functools.partial(
            _f1_stats_kernel, logit_thr=logit_thr, rows_valid=rows,
            row_block=row_block, acc_rows=acc_rows,
            blocks_per_core=blocks_per_core, total_blocks=total_blocks,
            needs_row_mask=needs_row_mask, may_overrun=may_overrun)

        part_shape = jax.ShapeDtypeStruct((ncores * acc_rows, LANES), jnp.float32)
        tp_p, pb_p, t_p = pl.pallas_call(
            kernel,
            out_shape=(part_shape, part_shape, part_shape),
            grid_spec=pltpu.PrefetchScalarGridSpec(
                num_scalar_prefetch=0,
                grid=(ncores, blocks_per_core),
                in_specs=[
                    pl.BlockSpec((row_block, LANES), in_map),
                    pl.BlockSpec((row_block, LANES), in_map),
                ],
                out_specs=(
                    pl.BlockSpec((acc_rows, LANES), out_map),
                    pl.BlockSpec((acc_rows, LANES), out_map),
                    pl.BlockSpec((acc_rows, LANES), out_map),
                ),
            ),
            compiler_params=pltpu.CompilerParams(
                dimension_semantics=("parallel", "arbitrary"),
                vmem_limit_bytes=VMEM_LIMIT_BYTES,
            ),
        )(pred2d, target2d)

        tp = jnp.sum(tp_p)
        sum_pb = jnp.sum(pb_p)
        sum_t = jnp.sum(t_p)

    rem = n - main_n
    if rem:
        # <128-element ragged tail: tiny plain-jnp pass instead of paying a
        # full-array pad/copy through HBM.
        pt = pred_flat[main_n:].astype(jnp.float32)
        tt = target_flat[main_n:].astype(jnp.float32)
        pbt = pt > jnp.float32(logit_thr)
        tp = tp + jnp.sum(jnp.where(pbt, tt, 0.0))
        sum_pb = sum_pb + jnp.sum(pbt.astype(jnp.float32))
        sum_t = sum_t + jnp.sum(tt)

    # Tiny epilogue: combine partials and form F1.
    fp = sum_pb - tp
    fn = sum_t - tp
    sm = jnp.float32(smooth)
    precision = (tp + sm) / (tp + fp + sm)
    recall = (tp + sm) / (tp + fn + sm)
    return 2.0 * (precision * recall) / (precision + recall + jnp.float32(1e-6))


def f1_ref(pred, target, threshold=0.5, smooth=1e-06):
    p = jax.nn.sigmoid(pred.astype(jnp.float32)).reshape(-1)
    pb = (p > threshold).astype(jnp.float32)
    t = target.reshape(-1).astype(jnp.float32)
    tp = jnp.sum(pb * t)
    fp = jnp.sum(pb * (1.0 - t))
    fn = jnp.sum((1.0 - pb) * t)
    prec = (tp + smooth) / (tp + fp + smooth)
    rec = (tp + smooth) / (tp + fn + smooth)
    return 2.0 * prec * rec / (prec + rec + 1e-6)


if __name__ == "__main__":
    key = jax.random.PRNGKey(0)
    k1, k2 = jax.random.split(key)

    # Small NCHW shapes: batch=2, channels=4, spatial=16x16 (logits + binary mask).
    pred = jax.random.normal(k1, (2, 4, 16, 16), dtype=jnp.float32)
    target = (jax.random.uniform(k2, (2, 4, 16, 16)) > 0.5).astype(jnp.float32)

    out = f1_score_pallas(pred, target)
    out = jax.block_until_ready(out)

    ref = f1_ref(pred, target)
    assert jnp.allclose(out, ref, rtol=1e-5, atol=1e-6), (out, ref)

    print("KERNEL_OK")
</pallas_src>

<mosaic_0001>
module attributes {stable_mosaic.version = 11 : i64} {
  func.func @_f1_stats_kernel(%arg0: i32, %arg1: i32, %arg2: memref<16x128xf32, #tpu.memory_space<vmem>>, %arg3: memref<16x128xf32, #tpu.memory_space<vmem>>, %arg4: memref<8x128xf32, #tpu.memory_space<vmem>>, %arg5: memref<8x128xf32, #tpu.memory_space<vmem>>, %arg6: memref<8x128xf32, #tpu.memory_space<vmem>>) attributes {dimension_semantics = [#tpu.dimension_semantics<parallel>, #tpu.dimension_semantics<arbitrary>], iteration_bounds = array<i64: 1, 1>, scalar_prefetch = 0 : i64, scratch_operands = 0 : i64, tpu.core_type = #tpu.core_type<tc>, window_params = [{transform_indices = @transform_0, window_bounds = array<i64: 16, 128>}, {transform_indices = @transform_1, window_bounds = array<i64: 16, 128>}, {transform_indices = @transform_2, window_bounds = array<i64: 8, 128>}, {transform_indices = @transform_3, window_bounds = array<i64: 8, 128>}, {transform_indices = @transform_4, window_bounds = array<i64: 8, 128>}]} {
    %c0_i32 = arith.constant 0 : i32
    %0 = arith.cmpi eq, %arg1, %c0_i32 : i32
    %1 = arith.extui %0 : i1 to i32
    %c0_i32_0 = arith.constant 0 : i32
    %2 = arith.cmpi ne, %1, %c0_i32_0 : i32
    scf.if %2 {
      %cst_20 = arith.constant 0.000000e+00 : f32
      %26 = vector.broadcast %cst_20 : f32 to vector<8x128xf32>
      %c0_21 = arith.constant 0 : index
      %c0_22 = arith.constant 0 : index
      %27 = vector.load %arg4[%c0_21, %c0_22] : memref<8x128xf32, #tpu.memory_space<vmem>>, vector<8x128xf32>
      tpu.vector_store %arg4[%c0_21, %c0_22], %26 {strides = array<i32>} : memref<8x128xf32, #tpu.memory_space<vmem>>, vector<8x128xf32>,
      %cst_23 = arith.constant 0.000000e+00 : f32
      %28 = vector.broadcast %cst_23 : f32 to vector<8x128xf32>
      %c0_24 = arith.constant 0 : index
      %c0_25 = arith.constant 0 : index
      %29 = vector.load %arg5[%c0_24, %c0_25] : memref<8x128xf32, #tpu.memory_space<vmem>>, vector<8x128xf32>
      tpu.vector_store %arg5[%c0_24, %c0_25], %28 {strides = array<i32>} : memref<8x128xf32, #tpu.memory_space<vmem>>, vector<8x128xf32>,
      %cst_26 = arith.constant 0.000000e+00 : f32
      %30 = vector.broadcast %cst_26 : f32 to vector<8x128xf32>
      %c0_27 = arith.constant 0 : index
      %c0_28 = arith.constant 0 : index
      %31 = vector.load %arg6[%c0_27, %c0_28] : memref<8x128xf32, #tpu.memory_space<vmem>>, vector<8x128xf32>
      tpu.vector_store %arg6[%c0_27, %c0_28], %30 {strides = array<i32>} : memref<8x128xf32, #tpu.memory_space<vmem>>, vector<8x128xf32>,
    } else {
    }
    %c0 = arith.constant 0 : index
    %c0_1 = arith.constant 0 : index
    %3 = vector.load %arg2[%c0, %c0_1] : memref<16x128xf32, #tpu.memory_space<vmem>>, vector<16x128xf32>
    %c0_2 = arith.constant 0 : index
    %c0_3 = arith.constant 0 : index
    %4 = vector.load %arg3[%c0_2, %c0_3] : memref<16x128xf32, #tpu.memory_space<vmem>>, vector<16x128xf32>
    %cst = arith.constant 0.000000e+00 : f32
    %5 = vector.broadcast %cst : f32 to vector<16x128xf32>
    %6 = arith.cmpf ogt, %3, %5 : vector<16x128xf32>
    %7 = arith.extui %6 : vector<16x128xi1> to vector<16x128xi32>
    %8 = arith.sitofp %7 : vector<16x128xi32> to vector<16x128xf32>
    %cst_4 = arith.constant 0.000000e+00 : f32
    %9 = vector.broadcast %cst_4 : f32 to vector<16x128xf32>
    %10 = arith.select %6, %4, %9 : vector<16x128xi1>, vector<16x128xf32>
    %c0_5 = arith.constant 0 : index
    %c0_6 = arith.constant 0 : index
    %11 = vector.load %arg4[%c0_5, %c0_6] : memref<8x128xf32, #tpu.memory_space<vmem>>, vector<8x128xf32>
    %12 = vector.shape_cast %10 : vector<16x128xf32> to vector<2x8x128xf32>
    %cst_7 = arith.constant dense<0.000000e+00> : vector<8x128xf32>
    %13 = vector.multi_reduction <add>, %12, %cst_7 [0] : vector<2x8x128xf32> to vector<8x128xf32>
    %14 = arith.addf %11, %13 : vector<8x128xf32>
    %c0_8 = arith.constant 0 : index
    %c0_9 = arith.constant 0 : index
    %15 = vector.load %arg4[%c0_8, %c0_9] : memref<8x128xf32, #tpu.memory_space<vmem>>, vector<8x128xf32>
    tpu.vector_store %arg4[%c0_8, %c0_9], %14 {strides = array<i32>} : memref<8x128xf32, #tpu.memory_space<vmem>>, vector<8x128xf32>,
    %c0_10 = arith.constant 0 : index
    %c0_11 = arith.constant 0 : index
    %16 = vector.load %arg5[%c0_10, %c0_11] : memref<8x128xf32, #tpu.memory_space<vmem>>, vector<8x128xf32>
    %17 = vector.shape_cast %8 : vector<16x128xf32> to vector<2x8x128xf32>
    %cst_12 = arith.constant dense<0.000000e+00> : vector<8x128xf32>
    %18 = vector.multi_reduction <add>, %17, %cst_12 [0] : vector<2x8x128xf32> to vector<8x128xf32>
    %19 = arith.addf %16, %18 : vector<8x128xf32>
    %c0_13 = arith.constant 0 : index
    %c0_14 = arith.constant 0 : index
    %20 = vector.load %arg5[%c0_13, %c0_14] : memref<8x128xf32, #tpu.memory_space<vmem>>, vector<8x128xf32>
    tpu.vector_store %arg5[%c0_13, %c0_14], %19 {strides = array<i32>} : memref<8x128xf32, #tpu.memory_space<vmem>>, vector<8x128xf32>,
    %c0_15 = arith.constant 0 : index
    %c0_16 = arith.constant 0 : index
    %21 = vector.load %arg6[%c0_15, %c0_16] : memref<8x128xf32, #tpu.memory_space<vmem>>, vector<8x128xf32>
    %22 = vector.shape_cast %4 : vector<16x128xf32> to vector<2x8x128xf32>
    %cst_17 = arith.constant dense<0.000000e+00> : vector<8x128xf32>
    %23 = vector.multi_reduction <add>, %22, %cst_17 [0] : vector<2x8x128xf32> to vector<8x128xf32>
    %24 = arith.addf %21, %23 : vector<8x128xf32>
    %c0_18 = arith.constant 0 : index
    %c0_19 = arith.constant 0 : index
    %25 = vector.load %arg6[%c0_18, %c0_19] : memref<8x128xf32, #tpu.memory_space<vmem>>, vector<8x128xf32>
    tpu.vector_store %arg6[%c0_18, %c0_19], %24 {strides = array<i32>} : memref<8x128xf32, #tpu.memory_space<vmem>>, vector<8x128xf32>,
    return
  }
  func.func @transform_0(%arg0: i32, %arg1: i32) -> (i32, i32) {
    %c1_i32 = arith.constant 1 : i32
    %0 = arith.muli %arg0, %c1_i32 : i32
    %1 = arith.addi %0, %arg1 : i32
    %c0_i32 = arith.constant 0 : i32
    %c0_i32_0 = arith.constant 0 : i32
    return %1, %c0_i32 : i32, i32
  }
  func.func @transform_1(%arg0: i32, %arg1: i32) -> (i32, i32) {
    %c1_i32 = arith.constant 1 : i32
    %0 = arith.muli %arg0, %c1_i32 : i32
    %1 = arith.addi %0, %arg1 : i32
    %c0_i32 = arith.constant 0 : i32
    %c0_i32_0 = arith.constant 0 : i32
    return %1, %c0_i32 : i32, i32
  }
  func.func @transform_2(%arg0: i32, %arg1: i32) -> (i32, i32) {
    %c0_i32 = arith.constant 0 : i32
    %c0_i32_0 = arith.constant 0 : i32
    return %arg0, %c0_i32 : i32, i32
  }
  func.func @transform_3(%arg0: i32, %arg1: i32) -> (i32, i32) {
    %c0_i32 = arith.constant 0 : i32
    %c0_i32_0 = arith.constant 0 : i32
    return %arg0, %c0_i32 : i32, i32
  }
  func.func @transform_4(%arg0: i32, %arg1: i32) -> (i32, i32) {
    %c0_i32 = arith.constant 0 : i32
    %c0_i32_0 = arith.constant 0 : i32
    return %arg0, %c0_i32 : i32, i32
  }
}

</mosaic_0001>

<llo_original>
// kernel: tpu_custom_call.1
$region0: #{tpu_custom_call.1}
  #allocation0 [shape = 'u32[]', space=smem, size = 0x4, offset = 0x4, fixed_abs, tag = 'smem constant byte address 0x4 - core index']
  #allocation1 [shape = 'u32[144,128]{1,0:T(1,128)}', space=vmem, size = 0x12000, scoped, tag = 'internal scratch']
  %s0 = inlined_call_operand.hbm [shape: f32[16,128], index: 0, kind: input, shape index: {}]
  %s1 = inlined_call_operand.hbm [shape: f32[16,128], index: 1, kind: input, shape index: {}]
  %s2 = inlined_call_operand.hbm [shape: f32[8,128], index: 2, kind: output, shape index: {0}]
  %s3 = inlined_call_operand.hbm [shape: f32[8,128], index: 3, kind: output, shape index: {1}]
  %s4 = inlined_call_operand.hbm [shape: f32[8,128], index: 4, kind: output, shape index: {2}]
  %5 = xla_tuple %s2, %s3, %s4
  %s6 = sld [smem:[#allocation0]]
  $region46: #{tpu_custom_call.1} parent=0
    _
  %s8 = ssub.s32 1, %s6
  %s9 = scalar_select 0, %s8, %s6
  $region1: #{tpu_custom_call.1} parent=0
    #allocation2 [shape = 'u8[8192]{0}', space=vmem, size = 0x2000, scoped, tag = 'input window, operand 0, single buffered']
    #allocation3 [shape = 's32[1]{0}', space=sflag, size = 0x4, scoped, tag = 'scoped memory for tpu_custom_call.1']
    #allocation4 [shape = 's32[1]{0}', space=sflag, size = 0x4, scoped, tag = 'scoped memory for tpu_custom_call.1']
    #allocation5 [shape = 'u8[8192]{0}', space=vmem, size = 0x2000, scoped, tag = 'input window, operand 1, single buffered']
    #allocation6 [shape = 's32[1]{0}', space=sflag, size = 0x4, scoped, tag = 'scoped memory for tpu_custom_call.1']
    #allocation7 [shape = 'u8[4096]{0}', space=vmem, size = 0x1000, scoped, tag = 'output window, operand 0, single buffered']
    #allocation8 [shape = 'u8[4096]{0}', space=vmem, size = 0x1000, scoped, tag = 'output window, operand 1, single buffered']
    #allocation9 [shape = 's32[1]{0}', space=sflag, size = 0x4, scoped, tag = 'scoped memory for tpu_custom_call.1']
    #allocation10 [shape = 'u8[4096]{0}', space=vmem, size = 0x1000, scoped, tag = 'output window, operand 2, single buffered']
    %10 = vsyncpa [#allocation3], 0
    %11 = vsyncpa [#allocation6], 0
    %12 = vsyncpa [#allocation4], 0
    %13 = vsyncpa [#allocation9], 0
    // Predicated region
    $region2: #{tpu_custom_call.1} parent=1 // pred_check
      _
    $region3: #{tpu_custom_call.1} parent=1 // pred_check_branch
      %15 = sbr.rel (0) target = $region5
    $region4: #{tpu_custom_call.1} parent=1 // pred_region
      %s16 = sadd.s32 0, 0
      %s17 = smul.u32 2, %s16
      %s19 = ssub.s32 256, 256
      %20 = vsyncadd [#allocation3], %s19
      %s21 = smul.addr %s17, 128
      %s22 = scalar_lea.hbm %s0, %s21
      %s23 = sshll.u32 [#allocation2], 4
      %s24 = int_to_ptr.vmem [resolvable:$true] %s23
      %29 = dma.hbm_to_vmem [thread:$0]  %s22, 256, %s24, [#allocation3], 128, 128, 8
    $region5: #{tpu_custom_call.1} parent=1 // pred_fallthru
      _
    // Predicated region
    $region6: #{tpu_custom_call.1} parent=1 // pred_check
      _
    $region7: #{tpu_custom_call.1} parent=1 // pred_check_branch
      %31 = sbr.rel (0) target = $region9
    $region8: #{tpu_custom_call.1} parent=1 // pred_region
      %s32 = sadd.s32 0, 0
      %s33 = smul.u32 2, %s32
      %s35 = ssub.s32 256, 256
      %36 = vsyncadd [#allocation6], %s35
      %s37 = smul.addr %s33, 128
      %s38 = scalar_lea.hbm %s1, %s37
      %s39 = sshll.u32 [#allocation5], 4
      %s40 = int_to_ptr.vmem [resolvable:$true] %s39
      %45 = dma.hbm_to_vmem [thread:$0]  %s38, 256, %s40, [#allocation6], 128, 128, 8
    $region9: #{tpu_custom_call.1} parent=1 // pred_fallthru
      _
    // Predicated region
    $region10: #{tpu_custom_call.1} parent=1 // pred_check
      _
    $region11: #{tpu_custom_call.1} parent=1 // pred_check_branch
      %47 = sbr.rel (0) target = $region13
    $region12: #{tpu_custom_call.1} parent=1 // pred_region
      %48 = dma.done [#allocation3], 256
    $region13: #{tpu_custom_call.1} parent=1 // pred_fallthru
      _
    // Predicated region
    $region14: #{tpu_custom_call.1} parent=1 // pred_check
      _
    $region15: #{tpu_custom_call.1} parent=1 // pred_check_branch
      %50 = sbr.rel (0) target = $region17
    $region16: #{tpu_custom_call.1} parent=1 // pred_region
      %51 = dma.done [#allocation6], 256
    $region17: #{tpu_custom_call.1} parent=1 // pred_fallthru
      _
    %s52 = sadd.s32 0, 0
    %s53 = smul.u32 2, %s52
    %s54 = sadd.s32 0, 0
    %s55 = smul.u32 2, %s54
    %p56 = scmp.eq.s32.totalorder 0, 0
    // Predicated region
    $region18: #{tpu_custom_call.1} parent=1 // pred_check
      %p57 = pneg %p56
    $region19: #{tpu_custom_call.1} parent=1 // pred_check_branch
      %59 = sbr.rel (%p57) target = $region21
    $region20: #{tpu_custom_call.1} parent=1 // pred_region
      %60 = vst [vmem:[#allocation7] sm:$0xff] 0.0
      %61 = vst [vmem:[#allocation8] sm:$0xff] 0.0
      %62 = vst [vmem:[#allocation10] sm:$0xff] 0.0
    $region21: #{tpu_custom_call.1} parent=1 // pred_fallthru
      _
    %v63 = vld [vmem:[#allocation2] sm:$0xff]
    %v64 = vld [vmem:[#allocation2 + $0x8] sm:$0xff]
    %v65 = vld [vmem:[#allocation5] sm:$0xff]
    %v66 = vld [vmem:[#allocation5 + $0x8] sm:$0xff]
    %vm67 = vcmp.gt.f32.partialorder %v63, 0.0
    %vm68 = vcmp.gt.f32.partialorder %v64, 0.0
    %v69 = vsel %vm67, 1, 0
    %v70 = vsel %vm68, 1, 0
    %v71 = vcvt.s32.f32 %v69
    %v72 = vcvt.s32.f32 %v70
    %v73 = vsel %vm67, %v65, 0.0
    %v74 = vsel %vm68, %v66, 0.0
    %v75 = vld [vmem:[#allocation7] sm:$0xff]
    %v76 = vadd.f32 %v73, %v74
    %v77 = vadd.f32 %v75, %v76
    %78 = vst [vmem:[#allocation7] sm:$0xff] %v77
    %v79 = vld [vmem:[#allocation8] sm:$0xff]
    %v80 = vadd.f32 %v71, %v72
    %v81 = vadd.f32 %v79, %v80
    %82 = vst [vmem:[#allocation8] sm:$0xff] %v81
    %v83 = vld [vmem:[#allocation10] sm:$0xff]
    %v84 = vadd.f32 %v65, %v66
    %v85 = vadd.f32 %v83, %v84
    %86 = vst [vmem:[#allocation10] sm:$0xff] %v85
    // Predicated region
    $region22: #{tpu_custom_call.1} parent=1 // pred_check
      _
    $region23: #{tpu_custom_call.1} parent=1 // pred_check_branch
      %88 = sbr.rel (0) target = $region25
    $region24: #{tpu_custom_call.1} parent=1 // pred_region
      %s90 = ssub.s32 128, 128
      %91 = vsyncadd [#allocation4], %s90
      %s93 = sshll.u32 [#allocation7], 4
      %s94 = int_to_ptr.vmem [resolvable:$true] %s93
      %96 = dma.vmem_to_hbm [thread:$0]  %s94, 128, %s2, [#allocation4]
    $region25: #{tpu_custom_call.1} parent=1 // pred_fallthru
      _
    // Predicated region
    $region26: #{tpu_custom_call.1} parent=1 // pred_check
      _
    $region27: #{tpu_custom_call.1} parent=1 // pred_check_branch
      %98 = sbr.rel (0) target = $region29
    $region28: #{tpu_custom_call.1} parent=1 // pred_region
      %s100 = ssub.s32 128, 128
      %101 = vsyncadd [#allocation9], %s100
      %s103 = sshll.u32 [#allocation8], 4
      %s104 = int_to_ptr.vmem [resolvable:$true] %s103
      %106 = dma.vmem_to_hbm [thread:$0]  %s104, 128, %s3, [#allocation9]
    $region29: #{tpu_custom_call.1} parent=1 // pred_fallthru
      _
    // Predicated region
    $region30: #{tpu_custom_call.1} parent=1 // pred_check
      _
    $region31: #{tpu_custom_call.1} parent=1 // pred_check_branch
      %108 = sbr.rel (0) target = $region33
    $region32: #{tpu_custom_call.1} parent=1 // pred_region
      %s110 = ssub.s32 128, 128
      %111 = vsyncadd [#allocation9], %s110
      %s113 = sshll.u32 [#allocation10], 4
      %s114 = int_to_ptr.vmem [resolvable:$true] %s113
      %116 = dma.vmem_to_hbm [thread:$0]  %s114, 128, %s4, [#allocation9]
    $region33: #{tpu_custom_call.1} parent=1 // pred_fallthru
      _
    // Predicated region
    $region34: #{tpu_custom_call.1} parent=1 // pred_check
      _
    $region35: #{tpu_custom_call.1} parent=1 // pred_check_branch
      %118 = sbr.rel (0) target = $region37
    $region36: #{tpu_custom_call.1} parent=1 // pred_region
      %119 = dma.done [#allocation4], 128
    $region37: #{tpu_custom_call.1} parent=1 // pred_fallthru
      _
    // Predicated region
    $region38: #{tpu_custom_call.1} parent=1 // pred_check
      _
    $region39: #{tpu_custom_call.1} parent=1 // pred_check_branch
      %121 = sbr.rel (0) target = $region41
    $region40: #{tpu_custom_call.1} parent=1 // pred_region
      %122 = dma.done [#allocation9], 128
    $region41: #{tpu_custom_call.1} parent=1 // pred_fallthru
      _
    // Predicated region
    $region42: #{tpu_custom_call.1} parent=1 // pred_check
      _
    $region43: #{tpu_custom_call.1} parent=1 // pred_check_branch
      %124 = sbr.rel (0) target = $region45
    $region44: #{tpu_custom_call.1} parent=1 // pred_region
      %125 = dma.done [#allocation9], 128
    $region45: #{tpu_custom_call.1} parent=1 // pred_fallthru
      _
    %126 = vsyncpa [#allocation3], 1
    %127 = vsyncpa [#allocation6], 1
    %128 = vsyncpa [#allocation4], 1
    %129 = vsyncpa [#allocation9], 1

</llo_original>
